<compile_context>
chip_gen: v6e
topology: v6e:2x2x1
jax: 0.10.0
libtpu: 0.0.40
codegen_flags: <defaults>
</compile_context>

<pallas_src>
import math

import jax
import jax.numpy as jnp
from jax.experimental import pallas as pl
from jax.experimental.pallas import tpu as pltpu


def _round_up(x, m):
    return ((x + m - 1) // m) * m


def _cdiv(a, b):
    return -(-a // b)


def fcn_regression_kernel(x_ref, t_ref, m_ref, wU_ref, wV1_ref, wV2_ref,
                          w2_ref, b_ref, o_ref):
    # x/t/m_ref : [BG, sub*F]   lane-packed activations (sub rows per group)
    # w*_ref    : [sub*F, sub*F] block-diagonal weights (bf16 or f32), VMEM-resident
    # b_ref     : [2, sub*F]    row 0 = tiled beta, row 1 = tiled b_final (f32)
    # o_ref     : [BG, sub*F]
    cdt = wU_ref.dtype                                     # MXU operand dtype (bf16 path)
    pre = jnp.dot(x_ref[...].astype(cdt), wU_ref[...],
                  preferred_element_type=jnp.float32)
    pre = pre + jnp.dot(t_ref[...].astype(cdt), wV1_ref[...],
                        preferred_element_type=jnp.float32)
    pre = pre + jnp.dot(m_ref[...].astype(cdt), wV2_ref[...],
                        preferred_element_type=jnp.float32)
    pre = pre + b_ref[0:1, :]                              # f32 bias add
    h = jnp.tanh(pre)                                      # f32 elementwise (EUP)
    out = jnp.dot(h.astype(cdt), w2_ref[...],
                  preferred_element_type=jnp.float32) + b_ref[1:2, :]
    o_ref[...] = out.astype(o_ref.dtype)


def prepare_params(params, compute_dtype=jnp.bfloat16):
    """Build kernel-ready weights ONCE (hoisted out of the per-call path)."""
    feat = params["U"].shape[0]
    # pack 'sub' consecutive rows into the 128-lane axis (lane-dense compute/stores)
    sub = 128 // feat if (feat <= 128 and 128 % feat == 0) else 1

    mask = 1.0 - jnp.eye(feat, dtype=jnp.float32)          # buffer `m` of the module
    eye_s = jnp.eye(sub, dtype=jnp.float32)

    def blockdiag(w_t):                                    # w_t: [F, F], already transposed
        return jnp.kron(eye_s, w_t).astype(compute_dtype)  # [sub*F, sub*F]

    wU = blockdiag((params["U"] * mask).T)
    wV1 = blockdiag((params["V1"] * mask).T)
    wV2 = blockdiag(params["V2"].T)
    w2 = blockdiag(params["W_final"].T)
    biases = jnp.stack([jnp.tile(params["beta"], sub),
                        jnp.tile(params["b_final"], sub)], axis=0).astype(jnp.float32)
    return {"wU": wU, "wV1": wV1, "wV2": wV2, "w2": w2, "biases": biases,
            "sub": sub, "feat": feat}


def fcn_regression_sequence(x, m_t, target, prepared, bg_max=2048):
    """Batched forward over a whole sequence: inputs [T, B, F] -> [T, B, F]."""
    sub = prepared["sub"]
    feat = prepared["feat"]

    T_, B_, F_ = x.shape
    assert F_ == feat
    rows = T_ * B_
    lane = sub * F_

    # --- tile selection: balanced tiles, >=2 grid steps when there is enough work ---
    G = _cdiv(rows, sub)                                   # row-groups
    num_tiles = max(1, _cdiv(G, bg_max))
    if num_tiles == 1 and G >= 16:
        num_tiles = 2                                      # let v7x's 2 TCs split the rows
    BG = _round_up(_cdiv(G, num_tiles), 8)                 # row-group tile (mult of 8)
    G_pad = BG * num_tiles
    rows_pad = G_pad * sub

    def pack(a):                                           # [T,B,F] -> [G_pad, sub*F], no concat
        a = a.reshape(rows, F_)
        if rows_pad != rows:
            a = jnp.pad(a, ((0, rows_pad - rows), (0, 0)))
        return a.reshape(G_pad, lane)                      # free row-major reshape

    Xp, Tp, Mp = pack(x), pack(target), pack(m_t)

    act_spec = pl.BlockSpec((BG, lane), lambda g: (g, 0))

    def resident(arr):                                     # whole array, VMEM-resident
        return pl.BlockSpec(arr.shape, lambda g: (0, 0))

    out_dense = pl.pallas_call(
        fcn_regression_kernel,
        out_shape=jax.ShapeDtypeStruct((G_pad, lane), x.dtype),
        grid_spec=pltpu.PrefetchScalarGridSpec(
            num_scalar_prefetch=0,
            grid=(num_tiles,),
            in_specs=[
                act_spec, act_spec, act_spec,              # x / target / m tiles (pipelined)
                resident(prepared["wU"]),
                resident(prepared["wV1"]),
                resident(prepared["wV2"]),
                resident(prepared["w2"]),
                resident(prepared["biases"]),
            ],
            out_specs=pl.BlockSpec((BG, lane), lambda g: (g, 0)),
        ),
        compiler_params=pltpu.CompilerParams(
            dimension_semantics=("parallel",)),            # independent row tiles
    )(Xp, Tp, Mp, prepared["wU"], prepared["wV1"], prepared["wV2"],
      prepared["w2"], prepared["biases"])

    return out_dense.reshape(rows_pad, F_)[:rows].reshape(T_, B_, F_)


def fcn_regression(x_t, m_t, target, prepared):
    """Single-step API matching the original PyTorch forward signature ([B, F] inputs)."""
    return fcn_regression_sequence(x_t[None], m_t[None], target[None], prepared)[0]


def _reference(x, m_t, target, params):
    feat = x.shape[-1]
    mask = 1.0 - jnp.eye(feat, dtype=jnp.float32)
    h = jnp.tanh(x @ (params["U"] * mask).T
                 + target @ (params["V1"] * mask).T
                 + m_t @ params["V2"].T
                 + params["beta"])
    return h @ params["W_final"].T + params["b_final"]


if __name__ == "__main__":
    feature_num = 16
    rnn_hid_size = 32   # only used by the (unused-in-forward) feat_reg submodule
    batch = 8
    seq_len = 8         # MRNN time steps, all processed by one pallas_call

    key = jax.random.PRNGKey(0)
    ks = jax.random.split(key, 9)

    stdv = 1.0 / math.sqrt(feature_num)
    u = lambda k, shape: jax.random.uniform(k, shape, jnp.float32, -stdv, stdv)

    params = {
        "U": u(ks[0], (feature_num, feature_num)),
        "V1": u(ks[1], (feature_num, feature_num)),
        "V2": u(ks[2], (feature_num, feature_num)),
        "beta": u(ks[3], (feature_num,)),
        # nn.Linear(feature_num, feature_num): weight [out,in], bias [out]
        "W_final": u(ks[4], (feature_num, feature_num)),
        "b_final": u(ks[5], (feature_num,)),
    }
    # TODO(synk): FeatureRegression(rnn_hid_size*2) submodule is constructed in
    # __init__ but never used in forward(); not implemented here.

    x = jax.random.normal(ks[6], (seq_len, batch, feature_num), jnp.float32)
    m = (jax.random.uniform(ks[7], (seq_len, batch, feature_num)) > 0.3).astype(jnp.float32)
    target = jax.random.normal(ks[8], (seq_len, batch, feature_num), jnp.float32)

    ref_seq = _reference(x, m, target, params)

    # --- performance path: bf16 MXU operands, f32 accumulate (relaxed tolerance) ---
    prep_bf16 = prepare_params(params, compute_dtype=jnp.bfloat16)
    out_seq = jax.block_until_ready(fcn_regression_sequence(x, m, target, prep_bf16))
    assert out_seq.shape == (seq_len, batch, feature_num)
    assert jnp.allclose(out_seq, ref_seq, atol=1e-1, rtol=1e-1), "bf16 sequence mismatch vs reference"

    out_step = jax.block_until_ready(fcn_regression(x[0], m[0], target[0], prep_bf16))
    assert jnp.allclose(out_step, ref_seq[0], atol=1e-1, rtol=1e-1), "bf16 single-step mismatch"

    # --- bit-accuracy path: same kernel with f32 weights (tight tolerance) ---
    prep_f32 = prepare_params(params, compute_dtype=jnp.float32)
    out_seq_f32 = jax.block_until_ready(fcn_regression_sequence(x, m, target, prep_f32))
    assert jnp.allclose(out_seq_f32, ref_seq, atol=1e-4, rtol=1e-4), "f32 sequence mismatch vs reference"

    print("KERNEL_OK")
</pallas_src>

<mosaic_0001>
module attributes {stable_mosaic.version = 11 : i64} {
  func.func @fcn_regression_kernel(%arg0: i32, %arg1: memref<8x128xf32, #tpu.memory_space<vmem>>, %arg2: memref<8x128xf32, #tpu.memory_space<vmem>>, %arg3: memref<8x128xf32, #tpu.memory_space<vmem>>, %arg4: memref<128x128xbf16, #tpu.memory_space<vmem>>, %arg5: memref<128x128xbf16, #tpu.memory_space<vmem>>, %arg6: memref<128x128xbf16, #tpu.memory_space<vmem>>, %arg7: memref<128x128xbf16, #tpu.memory_space<vmem>>, %arg8: memref<2x128xf32, #tpu.memory_space<vmem>>, %arg9: memref<8x128xf32, #tpu.memory_space<vmem>>) attributes {dimension_semantics = [#tpu.dimension_semantics<parallel>], iteration_bounds = array<i64: 1>, scalar_prefetch = 0 : i64, scratch_operands = 0 : i64, tpu.core_type = #tpu.core_type<tc>, window_params = [{transform_indices = @transform_0, window_bounds = array<i64: 8, 128>}, {transform_indices = @transform_1, window_bounds = array<i64: 8, 128>}, {transform_indices = @transform_2, window_bounds = array<i64: 8, 128>}, {pipeline_mode = #tpu.pipeline_mode<synchronous>, transform_indices = @transform_3, window_bounds = array<i64: 128, 128>}, {pipeline_mode = #tpu.pipeline_mode<synchronous>, transform_indices = @transform_4, window_bounds = array<i64: 128, 128>}, {pipeline_mode = #tpu.pipeline_mode<synchronous>, transform_indices = @transform_5, window_bounds = array<i64: 128, 128>}, {pipeline_mode = #tpu.pipeline_mode<synchronous>, transform_indices = @transform_6, window_bounds = array<i64: 128, 128>}, {pipeline_mode = #tpu.pipeline_mode<synchronous>, transform_indices = @transform_7, window_bounds = array<i64: 2, 128>}, {transform_indices = @transform_8, window_bounds = array<i64: 8, 128>}]} {
    %c0 = arith.constant 0 : index
    %c0_0 = arith.constant 0 : index
    %0 = vector.load %arg1[%c0, %c0_0] : memref<8x128xf32, #tpu.memory_space<vmem>>, vector<8x128xf32>
    %1 = arith.truncf %0 : vector<8x128xf32> to vector<8x128xbf16>
    %c0_1 = arith.constant 0 : index
    %c0_2 = arith.constant 0 : index
    %2 = vector.load %arg4[%c0_1, %c0_2] : memref<128x128xbf16, #tpu.memory_space<vmem>>, vector<128x128xbf16>
    %cst = arith.constant dense<0.000000e+00> : vector<8x128xf32>
    %3 = tpu.matmul %1, %2, %cst {dimension_numbers = #tpu.dot_dimension_numbers<[1], [0], [0], [1], [0, 0, 1, 1], [], []>} : vector<8x128xbf16>, vector<128x128xbf16>, vector<8x128xf32> -> vector<8x128xf32>
    %c0_3 = arith.constant 0 : index
    %c0_4 = arith.constant 0 : index
    %4 = vector.load %arg2[%c0_3, %c0_4] : memref<8x128xf32, #tpu.memory_space<vmem>>, vector<8x128xf32>
    %5 = arith.truncf %4 : vector<8x128xf32> to vector<8x128xbf16>
    %c0_5 = arith.constant 0 : index
    %c0_6 = arith.constant 0 : index
    %6 = vector.load %arg5[%c0_5, %c0_6] : memref<128x128xbf16, #tpu.memory_space<vmem>>, vector<128x128xbf16>
    %cst_7 = arith.constant dense<0.000000e+00> : vector<8x128xf32>
    %7 = tpu.matmul %5, %6, %cst_7 {dimension_numbers = #tpu.dot_dimension_numbers<[1], [0], [0], [1], [0, 0, 1, 1], [], []>} : vector<8x128xbf16>, vector<128x128xbf16>, vector<8x128xf32> -> vector<8x128xf32>
    %8 = arith.addf %3, %7 : vector<8x128xf32>
    %c0_8 = arith.constant 0 : index
    %c0_9 = arith.constant 0 : index
    %9 = vector.load %arg3[%c0_8, %c0_9] : memref<8x128xf32, #tpu.memory_space<vmem>>, vector<8x128xf32>
    %10 = arith.truncf %9 : vector<8x128xf32> to vector<8x128xbf16>
    %c0_10 = arith.constant 0 : index
    %c0_11 = arith.constant 0 : index
    %11 = vector.load %arg6[%c0_10, %c0_11] : memref<128x128xbf16, #tpu.memory_space<vmem>>, vector<128x128xbf16>
    %cst_12 = arith.constant dense<0.000000e+00> : vector<8x128xf32>
    %12 = tpu.matmul %10, %11, %cst_12 {dimension_numbers = #tpu.dot_dimension_numbers<[1], [0], [0], [1], [0, 0, 1, 1], [], []>} : vector<8x128xbf16>, vector<128x128xbf16>, vector<8x128xf32> -> vector<8x128xf32>
    %13 = arith.addf %8, %12 : vector<8x128xf32>
    %c0_13 = arith.constant 0 : index
    %c0_14 = arith.constant 0 : index
    %14 = vector.load %arg8[%c0_13, %c0_14] : memref<2x128xf32, #tpu.memory_space<vmem>>, vector<1x128xf32>
    %15 = vector.broadcast %14 : vector<1x128xf32> to vector<8x128xf32>
    %16 = arith.addf %13, %15 : vector<8x128xf32>
    %17 = math.tanh %16 : vector<8x128xf32>
    %18 = arith.truncf %17 : vector<8x128xf32> to vector<8x128xbf16>
    %c0_15 = arith.constant 0 : index
    %c0_16 = arith.constant 0 : index
    %19 = vector.load %arg7[%c0_15, %c0_16] : memref<128x128xbf16, #tpu.memory_space<vmem>>, vector<128x128xbf16>
    %cst_17 = arith.constant dense<0.000000e+00> : vector<8x128xf32>
    %20 = tpu.matmul %18, %19, %cst_17 {dimension_numbers = #tpu.dot_dimension_numbers<[1], [0], [0], [1], [0, 0, 1, 1], [], []>} : vector<8x128xbf16>, vector<128x128xbf16>, vector<8x128xf32> -> vector<8x128xf32>
    %c1 = arith.constant 1 : index
    %c0_18 = arith.constant 0 : index
    %21 = vector.load %arg8[%c1, %c0_18] : memref<2x128xf32, #tpu.memory_space<vmem>>, vector<1x128xf32>
    %22 = vector.broadcast %21 : vector<1x128xf32> to vector<8x128xf32>
    %23 = arith.addf %20, %22 : vector<8x128xf32>
    %c0_19 = arith.constant 0 : index
    %c0_20 = arith.constant 0 : index
    %24 = vector.load %arg9[%c0_19, %c0_20] : memref<8x128xf32, #tpu.memory_space<vmem>>, vector<8x128xf32>
    tpu.vector_store %arg9[%c0_19, %c0_20], %23 {strides = array<i32>} : memref<8x128xf32, #tpu.memory_space<vmem>>, vector<8x128xf32>,
    return
  }
  func.func @transform_0(%arg0: i32) -> (i32, i32) {
    %c0_i32 = arith.constant 0 : i32
    %c0_i32_0 = arith.constant 0 : i32
    return %arg0, %c0_i32 : i32, i32
  }
  func.func @transform_1(%arg0: i32) -> (i32, i32) {
    %c0_i32 = arith.constant 0 : i32
    %c0_i32_0 = arith.constant 0 : i32
    return %arg0, %c0_i32 : i32, i32
  }
  func.func @transform_2(%arg0: i32) -> (i32, i32) {
    %c0_i32 = arith.constant 0 : i32
    %c0_i32_0 = arith.constant 0 : i32
    return %arg0, %c0_i32 : i32, i32
  }
  func.func @transform_3(%arg0: i32) -> (i32, i32) {
    %c0_i32 = arith.constant 0 : i32
    %c0_i32_0 = arith.constant 0 : i32
    %c0_i32_1 = arith.constant 0 : i32
    return %c0_i32, %c0_i32_0 : i32, i32
  }
  func.func @transform_4(%arg0: i32) -> (i32, i32) {
    %c0_i32 = arith.constant 0 : i32
    %c0_i32_0 = arith.constant 0 : i32
    %c0_i32_1 = arith.constant 0 : i32
    return %c0_i32, %c0_i32_0 : i32, i32
  }
  func.func @transform_5(%arg0: i32) -> (i32, i32) {
    %c0_i32 = arith.constant 0 : i32
    %c0_i32_0 = arith.constant 0 : i32
    %c0_i32_1 = arith.constant 0 : i32
    return %c0_i32, %c0_i32_0 : i32, i32
  }
  func.func @transform_6(%arg0: i32) -> (i32, i32) {
    %c0_i32 = arith.constant 0 : i32
    %c0_i32_0 = arith.constant 0 : i32
    %c0_i32_1 = arith.constant 0 : i32
    return %c0_i32, %c0_i32_0 : i32, i32
  }
  func.func @transform_7(%arg0: i32) -> (i32, i32) {
    %c0_i32 = arith.constant 0 : i32
    %c0_i32_0 = arith.constant 0 : i32
    %c0_i32_1 = arith.constant 0 : i32
    return %c0_i32, %c0_i32_0 : i32, i32
  }
  func.func @transform_8(%arg0: i32) -> (i32, i32) {
    %c0_i32 = arith.constant 0 : i32
    %c0_i32_0 = arith.constant 0 : i32
    return %arg0, %c0_i32 : i32, i32
  }
}

</mosaic_0001>

<llo_original>
// kernel: tpu_custom_call.1
$region0: #{tpu_custom_call.1}
  #allocation0 [shape = 'u32[]', space=smem, size = 0x4, offset = 0x4, fixed_abs, tag = 'smem constant byte address 0x4 - core index']
  #allocation1 [shape = 'u32[144,128]{1,0:T(1,128)}', space=vmem, size = 0x12000, scoped, tag = 'internal scratch']
  %s0 = inlined_call_operand.hbm [shape: f32[8,128], index: 0, kind: input, shape index: {}]
  %s1 = inlined_call_operand.hbm [shape: f32[8,128], index: 1, kind: input, shape index: {}]
  %s2 = inlined_call_operand.hbm [shape: f32[8,128], index: 2, kind: input, shape index: {}]
  %s3 = inlined_call_operand.hbm [shape: bf16[128,128], index: 3, kind: input, shape index: {}]
  %s4 = inlined_call_operand.hbm [shape: bf16[128,128], index: 4, kind: input, shape index: {}]
  %s5 = inlined_call_operand.hbm [shape: bf16[128,128], index: 5, kind: input, shape index: {}]
  %s6 = inlined_call_operand.hbm [shape: bf16[128,128], index: 6, kind: input, shape index: {}]
  %s7 = inlined_call_operand.vmem [shape: f32[2,128], index: 7, kind: input, shape index: {}]
  %s8 = inlined_call_operand.hbm [shape: f32[8,128], index: 8, kind: output, shape index: {}]
  %s9 = sld [smem:[#allocation0]]
  $region70: #{tpu_custom_call.1} parent=0
    _
  %s11 = ssub.s32 1, %s9
  %s12 = scalar_select 0, %s11, %s9
  $region1: #{tpu_custom_call.1} parent=0
    #allocation2 [shape = 'u8[4096]{0}', space=vmem, size = 0x1000, scoped, tag = 'input window, operand 0, single buffered']
    #allocation3 [shape = 's32[1]{0}', space=sflag, size = 0x4, scoped, tag = 'scoped memory for tpu_custom_call.1']
    #allocation4 [shape = 's32[1]{0}', space=sflag, size = 0x4, scoped, tag = 'scoped memory for tpu_custom_call.1']
    #allocation5 [shape = 'u8[4096]{0}', space=vmem, size = 0x1000, scoped, tag = 'input window, operand 1, single buffered']
    #allocation6 [shape = 's32[1]{0}', space=sflag, size = 0x4, scoped, tag = 'scoped memory for tpu_custom_call.1']
    #allocation7 [shape = 'u8[4096]{0}', space=vmem, size = 0x1000, scoped, tag = 'input window, operand 2, single buffered']
    #allocation8 [shape = 'u8[32768]{0}', space=vmem, size = 0x8000, scoped, tag = 'input window, operand 3, single buffered']
    #allocation9 [shape = 's32[1]{0}', space=sflag, size = 0x4, scoped, tag = 'scoped memory for tpu_custom_call.1']
    #allocation10 [shape = 'u8[32768]{0}', space=vmem, size = 0x8000, scoped, tag = 'input window, operand 4, single buffered']
    #allocation11 [shape = 'u8[32768]{0}', space=vmem, size = 0x8000, scoped, tag = 'input window, operand 5, single buffered']
    #allocation12 [shape = 's32[1]{0}', space=sflag, size = 0x4, scoped, tag = 'scoped memory for tpu_custom_call.1']
    #allocation13 [shape = 'u8[32768]{0}', space=vmem, size = 0x8000, scoped, tag = 'input window, operand 6, single buffered']
    #allocation14 [shape = 'u8[4096]{0}', space=vmem, size = 0x1000, scoped, tag = 'output window, operand 0, single buffered']
    %13 = vsyncpa [#allocation3], 0
    %14 = vsyncpa [#allocation6], 0
    %15 = vsyncpa [#allocation9], 0
    %16 = vsyncpa [#allocation12], 0
    %17 = vsyncpa [#allocation4], 0
    // Predicated region
    $region2: #{tpu_custom_call.1} parent=1 // pred_check
      _
    $region3: #{tpu_custom_call.1} parent=1 // pred_check_branch
      %19 = sbr.rel (0) target = $region5
    $region4: #{tpu_custom_call.1} parent=1 // pred_region
      %s21 = ssub.s32 128, 128
      %22 = vsyncadd [#allocation3], %s21
      %s24 = sshll.u32 [#allocation2], 4
      %s25 = int_to_ptr.vmem [resolvable:$true] %s24
      %27 = dma.hbm_to_vmem [thread:$0]  %s0, 128, %s25, [#allocation3]
    $region5: #{tpu_custom_call.1} parent=1 // pred_fallthru
      _
    // Predicated region
    $region6: #{tpu_custom_call.1} parent=1 // pred_check
      _
    $region7: #{tpu_custom_call.1} parent=1 // pred_check_branch
      %29 = sbr.rel (0) target = $region9
    $region8: #{tpu_custom_call.1} parent=1 // pred_region
      %s31 = ssub.s32 128, 128
      %32 = vsyncadd [#allocation6], %s31
      %s34 = sshll.u32 [#allocation5], 4
      %s35 = int_to_ptr.vmem [resolvable:$true] %s34
      %37 = dma.hbm_to_vmem [thread:$0]  %s1, 128, %s35, [#allocation6]
    $region9: #{tpu_custom_call.1} parent=1 // pred_fallthru
      _
    // Predicated region
    $region10: #{tpu_custom_call.1} parent=1 // pred_check
      _
    $region11: #{tpu_custom_call.1} parent=1 // pred_check_branch
      %39 = sbr.rel (0) target = $region13
    $region12: #{tpu_custom_call.1} parent=1 // pred_region
      %s41 = ssub.s32 128, 128
      %42 = vsyncadd [#allocation6], %s41
      %s44 = sshll.u32 [#allocation7], 4
      %s45 = int_to_ptr.vmem [resolvable:$true] %s44
      %47 = dma.hbm_to_vmem [thread:$0]  %s2, 128, %s45, [#allocation6]
    $region13: #{tpu_custom_call.1} parent=1 // pred_fallthru
      _
    // Predicated region
    $region14: #{tpu_custom_call.1} parent=1 // pred_check
      _
    $region15: #{tpu_custom_call.1} parent=1 // pred_check_branch
      %49 = sbr.rel (0) target = $region17
    $region16: #{tpu_custom_call.1} parent=1 // pred_region
      %s51 = ssub.s32 1024, 1024
      %52 = vsyncadd [#allocation9], %s51
      %s53 = sshll.u32 [#allocation8], 4
      %s54 = int_to_ptr.vmem [resolvable:$true] %s53
      %59 = dma.hbm_to_vmem [thread:$0]  %s3, 1024, %s54, [#allocation9], 64, 64, 4
    $region17: #{tpu_custom_call.1} parent=1 // pred_fallthru
      _
    // Predicated region
    $region18: #{tpu_custom_call.1} parent=1 // pred_check
      _
    $region19: #{tpu_custom_call.1} parent=1 // pred_check_branch
      %61 = sbr.rel (0) target = $region21
    $region20: #{tpu_custom_call.1} parent=1 // pred_region
      %s63 = ssub.s32 1024, 1024
      %64 = vsyncadd [#allocation9], %s63
      %s65 = sshll.u32 [#allocation10], 4
      %s66 = int_to_ptr.vmem [resolvable:$true] %s65
      %71 = dma.hbm_to_vmem [thread:$0]  %s4, 1024, %s66, [#allocation9], 64, 64, 4
    $region21: #{tpu_custom_call.1} parent=1 // pred_fallthru
      _
    // Predicated region
    $region22: #{tpu_custom_call.1} parent=1 // pred_check
      _
    $region23: #{tpu_custom_call.1} parent=1 // pred_check_branch
      %73 = sbr.rel (0) target = $region25
    $region24: #{tpu_custom_call.1} parent=1 // pred_region
      %s75 = ssub.s32 1024, 1024
      %76 = vsyncadd [#allocation12], %s75
      %s77 = sshll.u32 [#allocation11], 4
      %s78 = int_to_ptr.vmem [resolvable:$true] %s77
      %83 = dma.hbm_to_vmem [thread:$0]  %s5, 1024, %s78, [#allocation12], 64, 64, 4
    $region25: #{tpu_custom_call.1} parent=1 // pred_fallthru
      _
    // Predicated region
    $region26: #{tpu_custom_call.1} parent=1 // pred_check
      _
    $region27: #{tpu_custom_call.1} parent=1 // pred_check_branch
      %85 = sbr.rel (0) target = $region29
    $region28: #{tpu_custom_call.1} parent=1 // pred_region
      %s87 = ssub.s32 1024, 1024
      %88 = vsyncadd [#allocation12], %s87
      %s89 = sshll.u32 [#allocation13], 4
      %s90 = int_to_ptr.vmem [resolvable:$true] %s89
      %95 = dma.hbm_to_vmem [thread:$0]  %s6, 1024, %s90, [#allocation12], 64, 64, 4
    $region29: #{tpu_custom_call.1} parent=1 // pred_fallthru
      _
    // Predicated region
    $region30: #{tpu_custom_call.1} parent=1 // pred_check
      _
    $region31: #{tpu_custom_call.1} parent=1 // pred_check_branch
      %97 = sbr.rel (0) target = $region33
    $region32: #{tpu_custom_call.1} parent=1 // pred_region
      _
    $region33: #{tpu_custom_call.1} parent=1 // pred_fallthru
      _
    // Predicated region
    $region34: #{tpu_custom_call.1} parent=1 // pred_check
      _
    $region35: #{tpu_custom_call.1} parent=1 // pred_check_branch
      %99 = sbr.rel (0) target = $region37
    $region36: #{tpu_custom_call.1} parent=1 // pred_region
      %100 = dma.done [#allocation3], 128
    $region37: #{tpu_custom_call.1} parent=1 // pred_fallthru
      _
    // Predicated region
    $region38: #{tpu_custom_call.1} parent=1 // pred_check
      _
    $region39: #{tpu_custom_call.1} parent=1 // pred_check_branch
      %102 = sbr.rel (0) target = $region41
    $region40: #{tpu_custom_call.1} parent=1 // pred_region
      %103 = dma.done [#allocation6], 128
    $region41: #{tpu_custom_call.1} parent=1 // pred_fallthru
      _
    // Predicated region
    $region42: #{tpu_custom_call.1} parent=1 // pred_check
      _
    $region43: #{tpu_custom_call.1} parent=1 // pred_check_branch
      %105 = sbr.rel (0) target = $region45
    $region44: #{tpu_custom_call.1} parent=1 // pred_region
      %106 = dma.done [#allocation6], 128
    $region45: #{tpu_custom_call.1} parent=1 // pred_fallthru
      _
    // Predicated region
    $region46: #{tpu_custom_call.1} parent=1 // pred_check
      _
    $region47: #{tpu_custom_call.1} parent=1 // pred_check_branch
      %108 = sbr.rel (0) target = $region49
    $region48: #{tpu_custom_call.1} parent=1 // pred_region
      %109 = dma.done [#allocation9], 1024
    $region49: #{tpu_custom_call.1} parent=1 // pred_fallthru
      _
    // Predicated region
    $region50: #{tpu_custom_call.1} parent=1 // pred_check
      _
    $region51: #{tpu_custom_call.1} parent=1 // pred_check_branch
      %111 = sbr.rel (0) target = $region53
    $region52: #{tpu_custom_call.1} parent=1 // pred_region
      %112 = dma.done [#allocation9], 1024
    $region53: #{tpu_custom_call.1} parent=1 // pred_fallthru
      _
    // Predicated region
    $region54: #{tpu_custom_call.1} parent=1 // pred_check
      _
    $region55: #{tpu_custom_call.1} parent=1 // pred_check_branch
      %114 = sbr.rel (0) target = $region57
    $region56: #{tpu_custom_call.1} parent=1 // pred_region
      %115 = dma.done [#allocation12], 1024
    $region57: #{tpu_custom_call.1} parent=1 // pred_fallthru
      _
    // Predicated region
    $region58: #{tpu_custom_call.1} parent=1 // pred_check
      _
    $region59: #{tpu_custom_call.1} parent=1 // pred_check_branch
      %117 = sbr.rel (0) target = $region61
    $region60: #{tpu_custom_call.1} parent=1 // pred_region
      %118 = dma.done [#allocation12], 1024
    $region61: #{tpu_custom_call.1} parent=1 // pred_fallthru
      _
    %v120 = vld [vmem:[#allocation2] sm:$0xff]
    %v121 = vpack.c.bf16 %v120, %v120
    %v122 = vld [vmem:[#allocation8] sm:$0xf]
    %v123 = vld [vmem:[#allocation8 + $0x4] sm:$0xf]
    %v124 = vld [vmem:[#allocation8 + $0x8] sm:$0xf]
    %v125 = vld [vmem:[#allocation8 + $0xc] sm:$0xf]
    %v126 = vld [vmem:[#allocation8 + $0x10] sm:$0xf]
    %v127 = vld [vmem:[#allocation8 + $0x14] sm:$0xf]
    %v128 = vld [vmem:[#allocation8 + $0x18] sm:$0xf]
    %v129 = vld [vmem:[#allocation8 + $0x1c] sm:$0xf]
    %v130 = vld [vmem:[#allocation8 + $0x20] sm:$0xf]
    %v131 = vld [vmem:[#allocation8 + $0x24] sm:$0xf]
    %v132 = vld [vmem:[#allocation8 + $0x28] sm:$0xf]
    %v133 = vld [vmem:[#allocation8 + $0x2c] sm:$0xf]
    %v134 = vld [vmem:[#allocation8 + $0x30] sm:$0xf]
    %v135 = vld [vmem:[#allocation8 + $0x34] sm:$0xf]
    %v136 = vld [vmem:[#allocation8 + $0x38] sm:$0xf]
    %v137 = vld [vmem:[#allocation8 + $0x3c] sm:$0xf]
    %v138 = vld [vmem:[#allocation5] sm:$0xff]
    %v139 = vpack.c.bf16 %v138, %v138
    %v140 = vld [vmem:[#allocation10] sm:$0xf]
    %v141 = vld [vmem:[#allocation10 + $0x4] sm:$0xf]
    %v142 = vld [vmem:[#allocation10 + $0x8] sm:$0xf]
    %v143 = vld [vmem:[#allocation10 + $0xc] sm:$0xf]
    %v144 = vld [vmem:[#allocation10 + $0x10] sm:$0xf]
    %v145 = vld [vmem:[#allocation10 + $0x14] sm:$0xf]
    %v146 = vld [vmem:[#allocation10 + $0x18] sm:$0xf]
    %v147 = vld [vmem:[#allocation10 + $0x1c] sm:$0xf]
    %v148 = vld [vmem:[#allocation10 + $0x20] sm:$0xf]
    %v149 = vld [vmem:[#allocation10 + $0x24] sm:$0xf]
    %v150 = vld [vmem:[#allocation10 + $0x28] sm:$0xf]
    %v151 = vld [vmem:[#allocation10 + $0x2c] sm:$0xf]
    %v152 = vld [vmem:[#allocation10 + $0x30] sm:$0xf]
    %v153 = vld [vmem:[#allocation10 + $0x34] sm:$0xf]
    %v154 = vld [vmem:[#allocation10 + $0x38] sm:$0xf]
    %v155 = vld [vmem:[#allocation10 + $0x3c] sm:$0xf]
    %v172 = vunpack.c.l.b16 %v140
    %v173 = vunpack.c.l.b16 %v141
    %v174 = vunpack.c.l.b16 %v142
    %v175 = vunpack.c.l.b16 %v143
    %v176 = vunpack.c.l.b16 %v144
    %v177 = vunpack.c.l.b16 %v145
    %v178 = vunpack.c.l.b16 %v146
    %v179 = vunpack.c.l.b16 %v147
    %v180 = vunpack.c.l.b16 %v148
    %v181 = vunpack.c.l.b16 %v149
    %v182 = vunpack.c.l.b16 %v150
    %v183 = vunpack.c.l.b16 %v151
    %v184 = vunpack.c.l.b16 %v152
    %v185 = vunpack.c.l.b16 %v153
    %v186 = vunpack.c.l.b16 %v154
    %v187 = vunpack.c.l.b16 %v155
    %v188 = vpack.c.b16 %v173, %v172
    %v189 = vpack.c.b16 %v175, %v174
    %v190 = vpack.c.b16 %v177, %v176
    %v191 = vpack.c.b16 %v179, %v178
    %v192 = vpack.c.b16 %v181, %v180
    %v193 = vpack.c.b16 %v183, %v182
    %v194 = vpack.c.b16 %v185, %v184
    %v195 = vpack.c.b16 %v187, %v186
    %204 = vmatprep.subr.bf16.mxu0 0
    %205 = vmatpush1.bf16.msra.mxu0 %v195
    %206 = vmatprep.subr.bf16.mxu0 0
    %207 = vmatpush1.bf16.msra.mxu0 %v194
    %208 = vmatprep.subr.bf16.mxu0 0
    %209 = vmatpush1.bf16.msra.mxu0 %v193
    %210 = vmatprep.subr.bf16.mxu0 0
    %211 = vmatpush1.bf16.msra.mxu0 %v192
    %212 = vmatprep.subr.bf16.mxu0 0
    %213 = vmatpush1.bf16.msra.mxu0 %v191
    %214 = vmatprep.subr.bf16.mxu0 0
    %215 = vmatpush1.bf16.msra.mxu0 %v190
    %216 = vmatprep.subr.bf16.mxu0 0
    %217 = vmatpush1.bf16.msra.mxu0 %v189
    %218 = vmatprep.subr.bf16.mxu0 0
    %219 = vmatpush1.bf16.msra.mxu0 %v188
    %220 = vmatprep.subr.bf16.mxu0 0
    %221 = vmatpush2.bf16.msra.mxu0 0
    %222 = vmatprep.subr.bf16.mxu0 0
    %223 = vmatpush2.bf16.msra.mxu0 0
    %224 = vmatprep.subr.bf16.mxu0 0
    %225 = vmatpush2.bf16.msra.mxu0 0
    %226 = vmatprep.subr.bf16.mxu0 0
    %227 = vmatpush2.bf16.msra.mxu0 0
    %228 = vmatprep.subr.bf16.mxu0 0
    %229 = vmatpush2.bf16.msra.mxu0 0
    %230 = vmatprep.subr.bf16.mxu0 0
    %231 = vmatpush2.bf16.msra.mxu0 0
    %232 = vmatprep.subr.bf16.mxu0 0
    %233 = vmatpush2.bf16.msra.mxu0 0
    %234 = vmatprep.subr.bf16.mxu0 0
    %235 = vmatpush2.bf16.msra.mxu0 0
    %236 = vmatprep.mubr.bf16.mxu0 0
    %237 = vmatmul.mubr.bf16.gmra.mxu0 %v139
    %v238 = vpop.f32.mrf.mxu0
    %v239 = vadd.f32 0.0, %v238
    %v240 = vpop.f32.mrf.mxu0
    %v241 = vpop.f32.mrf.mxu0
    %v242 = vpop.f32.mrf.mxu0
    %243 = vdwg.mxu0
    %v260 = vunpack.c.l.b16 %v122
    %v261 = vunpack.c.l.b16 %v123
    %v262 = vunpack.c.l.b16 %v124
    %v263 = vunpack.c.l.b16 %v125
    %v264 = vunpack.c.l.b16 %v126
    %v265 = vunpack.c.l.b16 %v127
    %v266 = vunpack.c.l.b16 %v128
    %v267 = vunpack.c.l.b16 %v129
    %v268 = vunpack.c.l.b16 %v130
    %v269 = vunpack.c.l.b16 %v131
    %v270 = vunpack.c.l.b16 %v132
    %v271 = vunpack.c.l.b16 %v133
    %v272 = vunpack.c.l.b16 %v134
    %v273 = vunpack.c.l.b16 %v135
    %v274 = vunpack.c.l.b16 %v136
    %v275 = vunpack.c.l.b16 %v137
    %v276 = vpack.c.b16 %v261, %v260
    %v277 = vpack.c.b16 %v263, %v262
    %v278 = vpack.c.b16 %v265, %v264
    %v279 = vpack.c.b16 %v267, %v266
    %v280 = vpack.c.b16 %v269, %v268
    %v281 = vpack.c.b16 %v271, %v270
    %v282 = vpack.c.b16 %v273, %v272
    %v283 = vpack.c.b16 %v275, %v274
    %292 = vmatprep.subr.bf16.mxu0 0
    %293 = vmatpush1.bf16.msra.mxu0 %v283
    %294 = vmatprep.subr.bf16.mxu0 0
    %295 = vmatpush1.bf16.msra.mxu0 %v282
    %296 = vmatprep.subr.bf16.mxu0 0
    %297 = vmatpush1.bf16.msra.mxu0 %v281
    %298 = vmatprep.subr.bf16.mxu0 0
    %299 = vmatpush1.bf16.msra.mxu0 %v280
    %300 = vmatprep.subr.bf16.mxu0 0
    %301 = vmatpush1.bf16.msra.mxu0 %v279
    %302 = vmatprep.subr.bf16.mxu0 0
    %303 = vmatpush1.bf16.msra.mxu0 %v278
    %304 = vmatprep.subr.bf16.mxu0 0
    %305 = vmatpush1.bf16.msra.mxu0 %v277
    %306 = vmatprep.subr.bf16.mxu0 0
    %307 = vmatpush1.bf16.msra.mxu0 %v276
    %308 = vmatprep.subr.bf16.mxu0 0
    %309 = vmatpush2.bf16.msra.mxu0 0
    %310 = vmatprep.subr.bf16.mxu0 0
    %311 = vmatpush2.bf16.msra.mxu0 0
    %312 = vmatprep.subr.bf16.mxu0 0
    %313 = vmatpush2.bf16.msra.mxu0 0
    %314 = vmatprep.subr.bf16.mxu0 0
    %315 = vmatpush2.bf16.msra.mxu0 0
    %316 = vmatprep.subr.bf16.mxu0 0
    %317 = vmatpush2.bf16.msra.mxu0 0
    %318 = vmatprep.subr.bf16.mxu0 0
    %319 = vmatpush2.bf16.msra.mxu0 0
    %320 = vmatprep.subr.bf16.mxu0 0
    %321 = vmatpush2.bf16.msra.mxu0 0
    %322 = vmatprep.subr.bf16.mxu0 0
    %323 = vmatpush2.bf16.msra.mxu0 0
    %324 = vmatprep.mubr.bf16.mxu0 0
    %325 = vmatmul.mubr.bf16.gmra.mxu0 %v121
    %v326 = vpop.f32.mrf.mxu0
    %v327 = vadd.f32 %v239, %v326
    %v328 = vpop.f32.mrf.mxu0
    %v329 = vpop.f32.mrf.mxu0
    %v330 = vpop.f32.mrf.mxu0
    %331 = vdwg.mxu0
    %v332 = vld [vmem:[#allocation7] sm:$0xff]
    %v333 = vpack.c.bf16 %v332, %v332
    %v334 = vld [vmem:[#allocation11] sm:$0xf]
    %v335 = vld [vmem:[#allocation11 + $0x4] sm:$0xf]
    %v336 = vld [vmem:[#allocation11 + $0x8] sm:$0xf]
    %v337 = vld [vmem:[#allocation11 + $0xc] sm:$0xf]
    %v338 = vld [vmem:[#allocation11 + $0x10] sm:$0xf]
    %v339 = vld [vmem:[#allocation11 + $0x14] sm:$0xf]
    %v340 = vld [vmem:[#allocation11 + $0x18] sm:$0xf]
    %v341 = vld [vmem:[#allocation11 + $0x1c] sm:$0xf]
    %v342 = vld [vmem:[#allocation11 + $0x20] sm:$0xf]
    %v343 = vld [vmem:[#allocation11 + $0x24] sm:$0xf]
    %v344 = vld [vmem:[#allocation11 + $0x28] sm:$0xf]
    %v345 = vld [vmem:[#allocation11 + $0x2c] sm:$0xf]
    %v346 = vld [vmem:[#allocation11 + $0x30] sm:$0xf]
    %v347 = vld [vmem:[#allocation11 + $0x34] sm:$0xf]
    %v348 = vld [vmem:[#allocation11 + $0x38] sm:$0xf]
    %v349 = vld [vmem:[#allocation11 + $0x3c] sm:$0xf]
    %v366 = vunpack.c.l.b16 %v334
    %v367 = vunpack.c.l.b16 %v335
    %v368 = vunpack.c.l.b16 %v336
    %v369 = vunpack.c.l.b16 %v337
    %v370 = vunpack.c.l.b16 %v338
    %v371 = vunpack.c.l.b16 %v339
    %v372 = vunpack.c.l.b16 %v340
    %v373 = vunpack.c.l.b16 %v341
    %v374 = vunpack.c.l.b16 %v342
    %v375 = vunpack.c.l.b16 %v343
    %v376 = vunpack.c.l.b16 %v344
    %v377 = vunpack.c.l.b16 %v345
    %v378 = vunpack.c.l.b16 %v346
    %v379 = vunpack.c.l.b16 %v347
    %v380 = vunpack.c.l.b16 %v348
    %v381 = vunpack.c.l.b16 %v349
    %v382 = vpack.c.b16 %v367, %v366
    %v383 = vpack.c.b16 %v369, %v368
    %v384 = vpack.c.b16 %v371, %v370
    %v385 = vpack.c.b16 %v373, %v372
    %v386 = vpack.c.b16 %v375, %v374
    %v387 = vpack.c.b16 %v377, %v376
    %v388 = vpack.c.b16 %v379, %v378
    %v389 = vpack.c.b16 %v381, %v380
    %398 = vmatprep.subr.bf16.mxu0 0
    %399 = vmatpush1.bf16.msra.mxu0 %v389
    %400 = vmatprep.subr.bf16.mxu0 0
    %401 = vmatpush1.bf16.msra.mxu0 %v388
    %402 = vmatprep.subr.bf16.mxu0 0
    %403 = vmatpush1.bf16.msra.mxu0 %v387
    %404 = vmatprep.subr.bf16.mxu0 0
    %405 = vmatpush1.bf16.msra.mxu0 %v386
    %406 = vmatprep.subr.bf16.mxu0 0
    %407 = vmatpush1.bf16.msra.mxu0 %v385
    %408 = vmatprep.subr.bf16.mxu0 0
    %409 = vmatpush1.bf16.msra.mxu0 %v384
    %410 = vmatprep.subr.bf16.mxu0 0
    %411 = vmatpush1.bf16.msra.mxu0 %v383
    %412 = vmatprep.subr.bf16.mxu0 0
    %413 = vmatpush1.bf16.msra.mxu0 %v382
    %414 = vmatprep.subr.bf16.mxu0 0
    %415 = vmatpush2.bf16.msra.mxu0 0
    %416 = vmatprep.subr.bf16.mxu0 0
    %417 = vmatpush2.bf16.msra.mxu0 0
    %418 = vmatprep.subr.bf16.mxu0 0
    %419 = vmatpush2.bf16.msra.mxu0 0
    %420 = vmatprep.subr.bf16.mxu0 0
    %421 = vmatpush2.bf16.msra.mxu0 0
    %422 = vmatprep.subr.bf16.mxu0 0
    %423 = vmatpush2.bf16.msra.mxu0 0
    %424 = vmatprep.subr.bf16.mxu0 0
    %425 = vmatpush2.bf16.msra.mxu0 0
    %426 = vmatprep.subr.bf16.mxu0 0
    %427 = vmatpush2.bf16.msra.mxu0 0
    %428 = vmatprep.subr.bf16.mxu0 0
    %429 = vmatpush2.bf16.msra.mxu0 0
    %430 = vmatprep.mubr.bf16.mxu0 0
    %431 = vmatmul.mubr.bf16.gmra.mxu0 %v333
    %v432 = vpop.f32.mrf.mxu0
    %v433 = vadd.f32 0.0, %v432
    %v434 = vpop.f32.mrf.mxu0
    %v435 = vpop.f32.mrf.mxu0
    %v436 = vpop.f32.mrf.mxu0
    %437 = vdwg.mxu0
    %v438 = vadd.f32 %v327, %v433
    %v439 = vld [vmem:[%s7] sm:$0x1]
    %v440 = vlaneseq
    %v441 = vshrl.u32 %v440, 7
    %v442 = vsub.s32 0, %v441
    %v443 = vrot.slane %v439, %v442
    %v444 = vadd.f32 %v438, %v443
    %v445 = vtanh.pop %v444
    %v446 = vpack.c.bf16 %v445, %v445
    %v447 = vld [vmem:[#allocation13] sm:$0xf]
    %v448 = vld [vmem:[#allocation13 + $0x4] sm:$0xf]
    %v449 = vld [vmem:[#allocation13 + $0x8] sm:$0xf]
    %v450 = vld [vmem:[#allocation13 + $0xc] sm:$0xf]
    %v451 = vld [vmem:[#allocation13 + $0x10] sm:$0xf]
    %v452 = vld [vmem:[#allocation13 + $0x14] sm:$0xf]
    %v453 = vld [vmem:[#allocation13 + $0x18] sm:$0xf]
    %v454 = vld [vmem:[#allocation13 + $0x1c] sm:$0xf]
    %v455 = vld [vmem:[#allocation13 + $0x20] sm:$0xf]
    %v456 = vld [vmem:[#allocation13 + $0x24] sm:$0xf]
    %v457 = vld [vmem:[#allocation13 + $0x28] sm:$0xf]
    %v458 = vld [vmem:[#allocation13 + $0x2c] sm:$0xf]
    %v459 = vld [vmem:[#allocation13 + $0x30] sm:$0xf]
    %v460 = vld [vmem:[#allocation13 + $0x34] sm:$0xf]
    %v461 = vld [vmem:[#allocation13 + $0x38] sm:$0xf]
    %v462 = vld [vmem:[#allocation13 + $0x3c] sm:$0xf]
    %v463 = vld [vmem:[%s7 + $0x1] sm:$0x1]
    %v464 = vlaneseq
    %v465 = vshrl.u32 %v464, 7
    %v466 = vsub.s32 0, %v465
    %v467 = vrot.slane %v463, %v466
    %v484 = vunpack.c.l.b16 %v447
    %v485 = vunpack.c.l.b16 %v448
    %v486 = vunpack.c.l.b16 %v449
    %v487 = vunpack.c.l.b16 %v450
    %v488 = vunpack.c.l.b16 %v451
    %v489 = vunpack.c.l.b16 %v452
    %v490 = vunpack.c.l.b16 %v453
    %v491 = vunpack.c.l.b16 %v454
    %v492 = vunpack.c.l.b16 %v455
    %v493 = vunpack.c.l.b16 %v456
    %v494 = vunpack.c.l.b16 %v457
    %v495 = vunpack.c.l.b16 %v458
    %v496 = vunpack.c.l.b16 %v459
    %v497 = vunpack.c.l.b16 %v460
    %v498 = vunpack.c.l.b16 %v461
    %v499 = vunpack.c.l.b16 %v462
    %v500 = vpack.c.b16 %v485, %v484
    %v501 = vpack.c.b16 %v487, %v486
    %v502 = vpack.c.b16 %v489, %v488
    %v503 = vpack.c.b16 %v491, %v490
    %v504 = vpack.c.b16 %v493, %v492
    %v505 = vpack.c.b16 %v495, %v494
    %v506 = vpack.c.b16 %v497, %v496
    %v507 = vpack.c.b16 %v499, %v498
    %516 = vmatprep.subr.bf16.mxu0 0
    %517 = vmatpush1.bf16.msra.mxu0 %v507
    %518 = vmatprep.subr.bf16.mxu0 0
    %519 = vmatpush1.bf16.msra.mxu0 %v506
    %520 = vmatprep.subr.bf16.mxu0 0
    %521 = vmatpush1.bf16.msra.mxu0 %v505
    %522 = vmatprep.subr.bf16.mxu0 0
    %523 = vmatpush1.bf16.msra.mxu0 %v504
    %524 = vmatprep.subr.bf16.mxu0 0
    %525 = vmatpush1.bf16.msra.mxu0 %v503
    %526 = vmatprep.subr.bf16.mxu0 0
    %527 = vmatpush1.bf16.msra.mxu0 %v502
    %528 = vmatprep.subr.bf16.mxu0 0
    %529 = vmatpush1.bf16.msra.mxu0 %v501
    %530 = vmatprep.subr.bf16.mxu0 0
    %531 = vmatpush1.bf16.msra.mxu0 %v500
    %532 = vmatprep.subr.bf16.mxu0 0
    %533 = vmatpush2.bf16.msra.mxu0 0
    %534 = vmatprep.subr.bf16.mxu0 0
    %535 = vmatpush2.bf16.msra.mxu0 0
    %536 = vmatprep.subr.bf16.mxu0 0
    %537 = vmatpush2.bf16.msra.mxu0 0
    %538 = vmatprep.subr.bf16.mxu0 0
    %539 = vmatpush2.bf16.msra.mxu0 0
    %540 = vmatprep.subr.bf16.mxu0 0
    %541 = vmatpush2.bf16.msra.mxu0 0
    %542 = vmatprep.subr.bf16.mxu0 0
    %543 = vmatpush2.bf16.msra.mxu0 0
    %544 = vmatprep.subr.bf16.mxu0 0
    %545 = vmatpush2.bf16.msra.mxu0 0
    %546 = vmatprep.subr.bf16.mxu0 0
    %547 = vmatpush2.bf16.msra.mxu0 0
    %548 = vmatprep.mubr.bf16.mxu0 0
    %549 = vmatmul.mubr.bf16.gmra.mxu0 %v446
    %v550 = vpop.f32.mrf.mxu0
    %v551 = vadd.f32 %v467, %v550
    %v552 = vpop.f32.mrf.mxu0
    %v553 = vpop.f32.mrf.mxu0
    %v554 = vpop.f32.mrf.mxu0
    %555 = vdwg.mxu0
    %556 = vst [vmem:[#allocation14] sm:$0xff] %v551
    // Predicated region
    $region62: #{tpu_custom_call.1} parent=1 // pred_check
      _
    $region63: #{tpu_custom_call.1} parent=1 // pred_check_branch
      %558 = sbr.rel (0) target = $region65
    $region64: #{tpu_custom_call.1} parent=1 // pred_region
      %s560 = ssub.s32 128, 128
      %561 = vsyncadd [#allocation4], %s560
      %s563 = sshll.u32 [#allocation14], 4
      %s564 = int_to_ptr.vmem [resolvable:$true] %s563
      %566 = dma.vmem_to_hbm [thread:$0]  %s564, 128, %s8, [#allocation4]
    $region65: #{tpu_custom_call.1} parent=1 // pred_fallthru
      _
    // Predicated region
    $region66: #{tpu_custom_call.1} parent=1 // pred_check
      _
    $region67: #{tpu_custom_call.1} parent=1 // pred_check_branch
      %568 = sbr.rel (0) target = $region69
    $region68: #{tpu_custom_call.1} parent=1 // pred_region
      %569 = dma.done [#allocation4], 128
    $region69: #{tpu_custom_call.1} parent=1 // pred_fallthru
      _
    %570 = vsyncpa [#allocation3], 1
    %571 = vsyncpa [#allocation6], 1
    %572 = vsyncpa [#allocation9], 1
    %573 = vsyncpa [#allocation12], 1
    %574 = vsyncpa [#allocation4], 1

</llo_original>
